<compile_context>
chip_gen: v7x
topology: tpu7x:2x2x1
jax: 0.10.0
libtpu: 0.0.40
codegen_flags: <defaults>
</compile_context>

<pallas_src>
import jax
import jax.numpy as jnp
from jax import lax
from jax.experimental import pallas as pl
from jax.experimental.pallas import tpu as pltpu


BN_EPS = 1e-5
LANE = 128
MAX_TILE_LANES = 8192                      # review target range 2048-8192
TILE_VMEM_BUDGET = 36 * 1024 * 1024        # double-buffered tile bytes; fits v7x 64 MiB
VMEM_LIMIT_BYTES = 48 * 1024 * 1024        # scoped VMEM ceiling (<= v7x physical, << v5e/v6e 128 MiB)


def _round_up(x, m):
    return (x + m - 1) // m * m


# --------------------------------------------------------------------------
# Sweep 1: 1x1 conv (MXU matmul) -> per-channel (sum, sumsq) only.
# --------------------------------------------------------------------------
def conv_stats_kernel(spec_ref, w_ref, stats_ref):
    """spec_ref: (2Cin, TN)  w_ref: (2Cout, 2Cin)
    stats_ref: (1, 2Cout, 2) f32 resident accumulator across the spatial-tile
    grid axis (one block per parallel half); col 0 = sum, col 1 = sumsq."""
    t = pl.program_id(1)

    @pl.when(t == 0)
    def _init():
        stats_ref[...] = jnp.zeros_like(stats_ref)

    # 1x1 conv == matmul (MXU); f32 accumulation regardless of operand dtype.
    y = jnp.dot(w_ref[...], spec_ref[...],
                preferred_element_type=jnp.float32)          # (2Cout, TN) f32
    # BN batch statistics: lane-axis reductions (XLU).
    # TODO(synk): E[y^2]-E[y]^2 in f32 can cancel for DC-heavy channels; the
    #             clamp in the epilogue is the only guard (centered pass would
    #             cost another sweep).
    s = jnp.sum(y, axis=-1, keepdims=True)                    # (2Cout, 1)
    ss = jnp.sum(y * y, axis=-1, keepdims=True)               # (2Cout, 1)
    stats_ref[0] += jnp.concatenate([s, ss], axis=-1)         # (2Cout, 2)


# --------------------------------------------------------------------------
# Sweep 2: recompute conv, apply precomputed BN scale/shift + ReLU,
#          emit real / imag slabs separately (lane-dense f32 outputs).
# --------------------------------------------------------------------------
def conv_bn_relu_kernel(spec_ref, w_ref, scale_ref, shift_ref, re_ref, im_ref):
    """spec_ref: (2Cin, TN)  w_ref: (2Cout, 2Cin)
    scale/shift: (2Cout, 1) f32   re_ref/im_ref: (Cout, TN) f32."""
    y = jnp.dot(w_ref[...], spec_ref[...],
                preferred_element_type=jnp.float32)           # (2Cout, TN)
    y = jnp.maximum(y * scale_ref[...] + shift_ref[...], 0.0)
    cout = re_ref.shape[0]
    re_ref[...] = y[:cout]
    im_ref[...] = y[cout:]


def fourier_unit_forward(x, conv_w, bn_gamma, bn_beta, *,
                         compute_dtype=jnp.bfloat16, tile_lanes=None):
    """FourierUnit forward (in_channels == out_channels, residual=True, bias=False).

    x:        (B, C, H, W) float32, NCHW
    conv_w:   (2*Cout, 2*Cin, 1, 1) float32  (PyTorch Conv2d weight layout)
    bn_gamma, bn_beta: (2*Cout,) float32
    compute_dtype: matmul-operand dtype (bf16 recommended; f32 accumulation).
    tile_lanes: optional lane-tile override (rounded up to a multiple of 128).
    """
    B, C, H, W = x.shape
    C2_out, C2_in = conv_w.shape[0], conv_w.shape[1]
    assert C2_in == 2 * C
    Cout = C2_out // 2
    assert Cout == C, "identity residual path only"
    # TODO(synk): in_channels != out_channels residual (1x1 identity conv) not implemented.

    # ---- FFT (glue; no Pallas primitive for FFT) ----
    # TODO(synk): rfft2/irfft2 have no Pallas equivalent; computed in plain JAX.
    ff = jnp.fft.rfft2(x.astype(jnp.float32), axes=(-2, -1), norm="ortho")
    Wf = ff.shape[-1]
    n_sp = H * Wf
    N = B * n_sp                                     # batch flattened into lanes

    # Channel-major lane-dense spectral layout: (2C, B*H*Wf) with channel order
    # [re_0..re_{C-1}, im_0..im_{C-1}].  Cast BEFORE pad/concat so no padded
    # f32 copy is materialized.
    re = ff.real.astype(compute_dtype).transpose(1, 0, 2, 3).reshape(C, N)
    im = ff.imag.astype(compute_dtype).transpose(1, 0, 2, 3).reshape(C, N)
    spec = jnp.concatenate([re, im], axis=0)         # (2C, N)

    # ---- lane-tile derivation against the per-generation VMEM budget ----
    dsize = jnp.dtype(compute_dtype).itemsize
    # double-buffered spec tile + double-buffered f32 real/imag output tiles
    per_lane_bytes = 2 * (2 * C * dsize) + 2 * (2 * Cout * 4)
    tn = (TILE_VMEM_BUDGET // per_lane_bytes) // LANE * LANE
    tn = max(LANE, min(tn, MAX_TILE_LANES))
    if tile_lanes is not None:
        tn = max(LANE, _round_up(int(tile_lanes), LANE))   # always a 128 multiple
    # keep both halves of the parallel grid axis busy for small problems
    tn = min(tn, _round_up(pl.cdiv(N, 2), LANE))

    G1 = pl.cdiv(N, 2 * tn)                          # spatial tiles per parallel half
    n_pad = 2 * G1 * tn
    if n_pad != N:
        # zero columns are exact through the bias-free conv and add nothing to
        # the BN sums (which are divided by the real element count N).
        spec = jnp.pad(spec, ((0, 0), (0, n_pad - N)))

    # Permute conv weight / BN params from PyTorch's interleaved channel order
    # (re, im, re, im, ...) to the concatenated order above (trace-time only).
    perm_in = jnp.concatenate([2 * jnp.arange(C), 2 * jnp.arange(C) + 1])
    perm_out = jnp.concatenate([2 * jnp.arange(Cout), 2 * jnp.arange(Cout) + 1])
    w2d = conv_w.reshape(C2_out, C2_in)[perm_out][:, perm_in].astype(compute_dtype)
    gamma = bn_gamma[perm_out].astype(jnp.float32)
    beta = bn_beta[perm_out].astype(jnp.float32)

    spec_spec = pl.BlockSpec((2 * C, tn), lambda g, t: (0, g * G1 + t))
    # NOTE: the weight block is constant across the grid; pipeline_mode=
    # pl.Buffered(1) would reclaim its double-buffer VMEM at large channel
    # counts, omitted here to keep lowering maximally portable.
    w_spec = pl.BlockSpec((C2_out, 2 * C), lambda g, t: (0, 0))

    flops_one_pass = 2 * C2_out * (2 * C) * n_pad

    # ---- Sweep 1: conv -> BN batch statistics only (no HBM conv output) ----
    stats = pl.pallas_call(
        conv_stats_kernel,
        out_shape=jax.ShapeDtypeStruct((2, C2_out, 2), jnp.float32),
        grid=(2, G1),
        in_specs=[spec_spec, w_spec],
        out_specs=pl.BlockSpec((1, C2_out, 2), lambda g, t: (g, 0, 0)),
        compiler_params=pltpu.CompilerParams(
            dimension_semantics=("parallel", "arbitrary"),
            vmem_limit_bytes=VMEM_LIMIT_BYTES),
        cost_estimate=pl.CostEstimate(
            flops=flops_one_pass, transcendentals=0,
            bytes_accessed=(2 * C * n_pad * dsize
                            + C2_out * 2 * C * dsize
                            + 2 * C2_out * 2 * 4)),
    )(spec, w2d)

    # ---- Tiny JAX epilogue: batch statistics -> per-channel scale/shift ----
    stats = jnp.sum(stats, axis=0)                    # (2Cout, 2): merge grid halves
    count = jnp.float32(N)                            # real element count (no pad)
    mean = stats[:, 0:1] / count
    var = jnp.maximum(stats[:, 1:2] / count - mean * mean, 0.0)   # biased variance
    inv_std = lax.rsqrt(var + BN_EPS)
    scale = gamma.reshape(-1, 1) * inv_std            # (2Cout, 1)
    shift = beta.reshape(-1, 1) - mean * scale        # (2Cout, 1)

    # ---- Sweep 2: recompute conv + BN affine + ReLU, split real/imag ----
    re_y, im_y = pl.pallas_call(
        conv_bn_relu_kernel,
        out_shape=(jax.ShapeDtypeStruct((Cout, n_pad), jnp.float32),
                   jax.ShapeDtypeStruct((Cout, n_pad), jnp.float32)),
        grid=(2, G1),
        in_specs=[spec_spec, w_spec,
                  pl.BlockSpec((C2_out, 1), lambda g, t: (0, 0)),
                  pl.BlockSpec((C2_out, 1), lambda g, t: (0, 0))],
        out_specs=(pl.BlockSpec((Cout, tn), lambda g, t: (0, g * G1 + t)),
                   pl.BlockSpec((Cout, tn), lambda g, t: (0, g * G1 + t))),
        compiler_params=pltpu.CompilerParams(
            dimension_semantics=("parallel", "parallel"),
            vmem_limit_bytes=VMEM_LIMIT_BYTES),
        cost_estimate=pl.CostEstimate(
            flops=flops_one_pass + 3 * C2_out * n_pad, transcendentals=0,
            bytes_accessed=(2 * C * n_pad * dsize
                            + C2_out * 2 * C * dsize
                            + 2 * C2_out * 4
                            + 2 * Cout * n_pad * 4)),
    )(spec, w2d, scale, shift)

    # ---- back to complex, inverse FFT, identity residual ----
    re_y = re_y[:, :N].reshape(Cout, B, H, Wf).transpose(1, 0, 2, 3)
    im_y = im_y[:, :N].reshape(Cout, B, H, Wf).transpose(1, 0, 2, 3)
    comp = re_y + 1j * im_y
    out = jnp.fft.irfft2(comp, s=(H, W), axes=(-2, -1), norm="ortho")
    # residual identity add: left to XLA (fuses into the irfft epilogue)
    return out.astype(jnp.float32) + x.astype(jnp.float32)


def _reference_forward(x, conv_w, bn_gamma, bn_beta):
    """Pure-jnp reference mirroring the PyTorch module (training-mode BN)."""
    B, C, H, W = x.shape
    C2_out = conv_w.shape[0]
    Cout = C2_out // 2
    ff = jnp.fft.rfft2(x, axes=(-2, -1), norm="ortho")
    Wf = ff.shape[-1]
    ffted = jnp.stack((ff.real, ff.imag), axis=-1)
    ffted = jnp.transpose(ffted, (0, 1, 4, 2, 3)).reshape(B, 2 * C, H, Wf)
    # 1x1 conv
    y = jnp.einsum("bchw,oc->bohw", ffted, conv_w.reshape(C2_out, 2 * C))
    # BatchNorm2d (training-mode batch stats) + ReLU
    mean = jnp.mean(y, axis=(0, 2, 3), keepdims=True)
    var = jnp.mean(jnp.square(y - mean), axis=(0, 2, 3), keepdims=True)
    y = (y - mean) / jnp.sqrt(var + BN_EPS)
    y = y * bn_gamma.reshape(1, -1, 1, 1) + bn_beta.reshape(1, -1, 1, 1)
    y = jnp.maximum(y, 0.0)
    y = y.reshape(B, Cout, 2, H, Wf).transpose(0, 1, 3, 4, 2)
    comp = y[..., 0] + 1j * y[..., 1]
    out = jnp.fft.irfft2(comp, s=(H, W), axes=(-2, -1), norm="ortho")
    return out + x


if __name__ == "__main__":
    B, C, H, W = 2, 4, 16, 16          # in_channels == out_channels == 4
    Cout = C

    key = jax.random.PRNGKey(0)
    kx, kw = jax.random.split(key)
    x = jax.random.normal(kx, (B, C, H, W), dtype=jnp.float32)

    # Deterministic parameter init (synthetic; matches PyTorch shapes)
    # Conv2d(2C -> 2Cout, k=1, bias=False): weight (2Cout, 2C, 1, 1)
    conv_w = (jax.random.normal(kw, (2 * Cout, 2 * C, 1, 1), dtype=jnp.float32)
              * (1.0 / jnp.sqrt(2.0 * C)))
    # BatchNorm2d(2Cout) default init: gamma=1, beta=0
    bn_gamma = jnp.ones((2 * Cout,), dtype=jnp.float32)
    bn_beta = jnp.zeros((2 * Cout,), dtype=jnp.float32)

    ref = _reference_forward(x, conv_w, bn_gamma, bn_beta)

    # f32-operand path: tight tolerance vs reference
    out_f32 = fourier_unit_forward(x, conv_w, bn_gamma, bn_beta,
                                   compute_dtype=jnp.float32)
    out_f32 = jax.block_until_ready(out_f32)
    assert out_f32.shape == (B, Cout, H, W)
    assert jnp.allclose(out_f32, ref, atol=2e-4, rtol=2e-4), "f32 mismatch vs reference"

    # bf16 matmul-operand path (perf default): looser tolerance (bf16 rounding)
    out_bf16 = fourier_unit_forward(x, conv_w, bn_gamma, bn_beta,
                                    compute_dtype=jnp.bfloat16)
    out_bf16 = jax.block_until_ready(out_bf16)
    assert jnp.allclose(out_bf16, ref, atol=5e-2, rtol=5e-2), "bf16 mismatch vs reference"

    print("KERNEL_OK")
</pallas_src>

<mosaic_0001>
module attributes {stable_mosaic.version = 11 : i64} {
  func.func @conv_stats_kernel(%arg0: i32, %arg1: i32, %arg2: memref<8x256xf32, #tpu.memory_space<vmem>>, %arg3: memref<8x8xf32, #tpu.memory_space<vmem>>, %arg4: memref<1x8x2xf32, #tpu.memory_space<vmem>>) attributes {dimension_semantics = [#tpu.dimension_semantics<parallel>, #tpu.dimension_semantics<arbitrary>], iteration_bounds = array<i64: 2, 1>, scalar_prefetch = 0 : i64, scratch_operands = 0 : i64, tpu.core_type = #tpu.core_type<tc>, window_params = [{transform_indices = @transform_0, window_bounds = array<i64: 8, 256>}, {pipeline_mode = #tpu.pipeline_mode<synchronous>, transform_indices = @transform_1, window_bounds = array<i64: 8, 8>}, {transform_indices = @transform_2, window_bounds = array<i64: 1, 8, 2>}]} {
    %c0_i32 = arith.constant 0 : i32
    %0 = arith.cmpi eq, %arg1, %c0_i32 : i32
    %1 = arith.extui %0 : i1 to i32
    %c0_i32_0 = arith.constant 0 : i32
    %2 = arith.cmpi ne, %1, %c0_i32_0 : i32
    scf.if %2 {
      %cst_12 = arith.constant 0.000000e+00 : f32
      %18 = vector.broadcast %cst_12 : f32 to vector<1x8x2xf32>
      %c0_13 = arith.constant 0 : index
      %c0_14 = arith.constant 0 : index
      %c0_15 = arith.constant 0 : index
      %19 = vector.load %arg4[%c0_13, %c0_14, %c0_15] : memref<1x8x2xf32, #tpu.memory_space<vmem>>, vector<1x8x2xf32>
      tpu.vector_store %arg4[%c0_13, %c0_14, %c0_15], %18 {strides = array<i32>} : memref<1x8x2xf32, #tpu.memory_space<vmem>>, vector<1x8x2xf32>,
    } else {
    }
    %c0 = arith.constant 0 : index
    %c0_1 = arith.constant 0 : index
    %3 = vector.load %arg3[%c0, %c0_1] : memref<8x8xf32, #tpu.memory_space<vmem>>, vector<8x8xf32>
    %c0_2 = arith.constant 0 : index
    %c0_3 = arith.constant 0 : index
    %4 = vector.load %arg2[%c0_2, %c0_3] : memref<8x256xf32, #tpu.memory_space<vmem>>, vector<8x256xf32>
    %cst = arith.constant dense<0.000000e+00> : vector<8x256xf32>
    %5 = tpu.matmul %3, %4, %cst {dimension_numbers = #tpu.dot_dimension_numbers<[1], [0], [0], [1], [0, 0, 1, 1], [], []>} : vector<8x8xf32>, vector<8x256xf32>, vector<8x256xf32> -> vector<8x256xf32>
    %cst_4 = arith.constant dense<0.000000e+00> : vector<8xf32>
    %6 = vector.multi_reduction <add>, %5, %cst_4 [1] : vector<8x256xf32> to vector<8xf32>
    %7 = vector.shape_cast %6 : vector<8xf32> to vector<8x1xf32>
    %8 = arith.mulf %5, %5 : vector<8x256xf32>
    %cst_5 = arith.constant dense<0.000000e+00> : vector<8xf32>
    %9 = vector.multi_reduction <add>, %8, %cst_5 [1] : vector<8x256xf32> to vector<8xf32>
    %10 = vector.shape_cast %9 : vector<8xf32> to vector<8x1xf32>
    %c0_6 = arith.constant 0 : index
    %c0_7 = arith.constant 0 : index
    %c0_8 = arith.constant 0 : index
    %11 = vector.load %arg4[%c0_6, %c0_7, %c0_8] : memref<1x8x2xf32, #tpu.memory_space<vmem>>, vector<1x8x2xf32>
    %12 = vector.shape_cast %11 : vector<1x8x2xf32> to vector<8x2xf32>
    %13 = tpu.concatenate %7, %10 in 1 : vector<8x1xf32>, vector<8x1xf32> -> vector<8x2xf32>
    %14 = arith.addf %12, %13 : vector<8x2xf32>
    %c0_9 = arith.constant 0 : index
    %c0_10 = arith.constant 0 : index
    %c0_11 = arith.constant 0 : index
    %15 = vector.load %arg4[%c0_9, %c0_10, %c0_11] : memref<1x8x2xf32, #tpu.memory_space<vmem>>, vector<1x8x2xf32>
    %16 = vector.shape_cast %15 : vector<1x8x2xf32> to vector<8x2xf32>
    %17 = vector.shape_cast %14 : vector<8x2xf32> to vector<1x8x2xf32>
    tpu.vector_store %arg4[%c0_9, %c0_10, %c0_11], %17 {strides = array<i32>} : memref<1x8x2xf32, #tpu.memory_space<vmem>>, vector<1x8x2xf32>,
    return
  }
  func.func @transform_0(%arg0: i32, %arg1: i32) -> (i32, i32) {
    %c1_i32 = arith.constant 1 : i32
    %0 = arith.muli %arg0, %c1_i32 : i32
    %1 = arith.addi %0, %arg1 : i32
    %c0_i32 = arith.constant 0 : i32
    %c0_i32_0 = arith.constant 0 : i32
    return %c0_i32, %1 : i32, i32
  }
  func.func @transform_1(%arg0: i32, %arg1: i32) -> (i32, i32) {
    %c0_i32 = arith.constant 0 : i32
    %c0_i32_0 = arith.constant 0 : i32
    %c0_i32_1 = arith.constant 0 : i32
    return %c0_i32, %c0_i32_0 : i32, i32
  }
  func.func @transform_2(%arg0: i32, %arg1: i32) -> (i32, i32, i32) {
    %c0_i32 = arith.constant 0 : i32
    %c0_i32_0 = arith.constant 0 : i32
    %c0_i32_1 = arith.constant 0 : i32
    return %arg0, %c0_i32, %c0_i32_0 : i32, i32, i32
  }
}

</mosaic_0001>

<llo_original>
// kernel: tpu_custom_call.1
$region0: #{tpu_custom_call.1}
  #allocation0 [shape = 'u32[]', space=smem, size = 0x4, offset = 0x4, fixed_abs, tag = 'smem constant byte address 0x4 - core index']
  #allocation1 [shape = 'u32[144,128]{1,0:T(1,128)}', space=vmem, size = 0x12000, scoped, tag = 'internal scratch']
  %s0 = inlined_call_operand.hbm [shape: f32[8,512], index: 0, kind: input, shape index: {}]
  %s1 = inlined_call_operand.hbm [shape: f32[8,8], index: 1, kind: input, shape index: {}]
  %s2 = inlined_call_operand.vmem [shape: f32[2,8,2], index: 2, kind: output, shape index: {}]
  %s3 = sld [smem:[#allocation0]]
  $region53: #{tpu_custom_call.1} parent=0
    _
  %s5 = ssub.s32 1, %s3
  %s6 = scalar_select 0, %s5, %s3
  $region1: #{tpu_custom_call.1} parent=0
    #allocation2 [shape = 'u8[16384]{0}', space=vmem, size = 0x4000, scoped, tag = 'input window, operand 0']
    #allocation3 [shape = 's32[2]{0}', space=sflag, size = 0x8, scoped, tag = 'scoped memory for tpu_custom_call.1']
    #allocation4 [shape = 'u8[4096]{0}', space=vmem, size = 0x1000, scoped, tag = 'input window, operand 1, single buffered']
    #allocation5 [shape = 's32[1]{0}', space=sflag, size = 0x4, scoped, tag = 'scoped memory for tpu_custom_call.1']
    %7 = vsyncpa [#allocation3], 0
    %s8 = scalar_lea.sflag [#allocation3], 1
    %9 = vsyncpa %s8, 0
    %10 = vsyncpa [#allocation5], 0
    loop: start=0, step=1, limit=4
    $region2: #{tpu_custom_call.1} parent=1 // loop_pre_header
      _
    $region3: #{tpu_custom_call.1} parent=1 // loop_header
      %s12 = sphi 0, %s16
      %p13 = scmp.ge.s32.totalorder %s12, 4
      %s19 = sphi 0, %s31
      %s20 = sphi 0, %s27
      %s21 = sphi 0, %s19
      %s22 = sphi 0, %s20
      %s23 = sphi 0, %s21
      %s24 = sphi 0, %s22
      %s36 = sphi 0, %s38
      %s39 = sphi 0, %s36
      %s40 = sphi 0, %s39
      %s56 = sphi 0, %s40
      %s60 = sphi 0, %s60
      %s62 = sphi 0, %s60
      %s63 = sphi 0, %s62
      %s77 = sphi 0, %s63
      %s83 = sphi 0, %s85
      %s86 = sphi 0, %s83
      %s87 = sphi 0, %s86
      %s103 = sphi 0, %s87
    $region4: #{tpu_custom_call.1} parent=1 // loop_header_branch
      %15 = sbr.rel (%p13) target = $region8
    $region5: #{tpu_custom_call.1} parent=1 // loop_body
      %s17 = ssub.s32 %s12, 1
      %s18 = ssub.s32 %s12, 2
      %s25 = sadd.s32 1, %s20
      %p26 = scmp.ge.s32.totalorder %s25, 1
      %s27 = scalar_select %p26, 0, %s25
      %s28 = sadd.s32 1, %s19
      %s29 = scalar_select %p26, %s28, %s19
      %p30 = scmp.ge.s32.totalorder %s29, 2
      %s31 = scalar_select %p30, 0, %s29
      %s32 = sadd.s32 %s19, %s20
      %s33 = sadd.s32 %s31, %s27
      %s34 = ssub.s32 %s32, %s33
      %p35 = scmp.eq.s32.totalorder %s34, 0
      %s37 = sadd.s32 %s36, 1
      %s38 = scalar_select %p35, %s36, %s37
      %p41 = pneg %p35
      %p42 = scmp.eq.s32.totalorder %s12, 1
      %p43 = por %p41, %p42
      %p44 = scmp.ne.s32.totalorder %s36, %s39
      %p45 = scmp.eq.s32.totalorder %s12, 0
      %p46 = por %p44, %p45
      %p47 = scmp.ne.s32.totalorder %s36, %s39
      %p48 = scmp.eq.s32.totalorder %s17, 1
      %p49 = por %p47, %p48
      %p50 = scmp.ne.s32.totalorder %s39, %s40
      %p51 = scmp.eq.s32.totalorder %s17, 0
      %p52 = por %p50, %p51
      %p53 = scmp.ne.s32.totalorder %s39, %s40
      %p54 = scmp.eq.s32.totalorder %s18, 1
      %p55 = por %p53, %p54
      %p57 = scmp.ne.s32.totalorder %s40, %s56
      %p58 = scmp.eq.s32.totalorder %s18, 0
      %p59 = por %p57, %p58
      %s61 = sadd.s32 %s60, 1
      %p64 = scmp.eq.s32.totalorder %s12, 1
      %p65 = scmp.ne.s32.totalorder %s60, %s62
      %p66 = scmp.eq.s32.totalorder %s12, 0
      %p67 = por %p65, %p66
      %p68 = scmp.ne.s32.totalorder %s60, %s62
      %p69 = scmp.eq.s32.totalorder %s17, 1
      %p70 = por %p68, %p69
      %p71 = scmp.ne.s32.totalorder %s62, %s63
      %p72 = scmp.eq.s32.totalorder %s17, 0
      %p73 = por %p71, %p72
      %p74 = scmp.ne.s32.totalorder %s62, %s63
      %p75 = scmp.eq.s32.totalorder %s18, 1
      %p76 = por %p74, %p75
      %p78 = scmp.ne.s32.totalorder %s63, %s77
      %p79 = scmp.eq.s32.totalorder %s18, 0
      %p80 = por %p78, %p79
      %s81 = ssub.s32 %s19, %s31
      %p82 = scmp.eq.s32.totalorder %s81, 0
      %s84 = sadd.s32 %s83, 1
      %s85 = scalar_select %p82, %s83, %s84
      %p88 = pneg %p82
      %p89 = scmp.eq.s32.totalorder %s12, 1
      %p90 = por %p88, %p89
      %p91 = scmp.ne.s32.totalorder %s83, %s86
      %p92 = scmp.eq.s32.totalorder %s12, 0
      %p93 = por %p91, %p92
      %p94 = scmp.ne.s32.totalorder %s83, %s86
      %p95 = scmp.eq.s32.totalorder %s17, 1
      %p96 = por %p94, %p95
      %p97 = scmp.ne.s32.totalorder %s86, %s87
      %p98 = scmp.eq.s32.totalorder %s17, 0
      %p99 = por %p97, %p98
      %p100 = scmp.ne.s32.totalorder %s86, %s87
      %p101 = scmp.eq.s32.totalorder %s18, 1
      %p102 = por %p100, %p101
      %p104 = scmp.ne.s32.totalorder %s87, %s103
      %p105 = scmp.eq.s32.totalorder %s18, 0
      %p106 = por %p104, %p105
      %p107 = scmp.le.s32.totalorder 1, %s12
      %p108 = scmp.lt.s32.totalorder %s12, 3
      %p109 = pnand %p107, %p108
      %p110 = pneg %p109
      // Predicated region
      $region9: #{tpu_custom_call.1} parent=5 // pred_check
        _
      $region10: #{tpu_custom_call.1} parent=5 // pred_check_branch
        %112 = sbr.rel (%p109) target = $region12
      $region11: #{tpu_custom_call.1} parent=5 // pred_region
        %s113 = ssub.s32 %s12, 1
        // Predicated region
        $region13: #{tpu_custom_call.1} parent=11 // pred_check
          %p114 = pneg %p73
        $region14: #{tpu_custom_call.1} parent=11 // pred_check_branch
          %116 = sbr.rel (%p114) target = $region16
        $region15: #{tpu_custom_call.1} parent=11 // pred_region
          %s118 = ssub.s32 128, 128
          %119 = vsyncadd [#allocation5], %s118
          %s121 = sshll.u32 [#allocation4], 4
          %s122 = int_to_ptr.vmem [resolvable:$true] %s121
          %124 = dma.hbm_to_vmem [thread:$0]  %s1, 128, %s122, [#allocation5]
        $region16: #{tpu_custom_call.1} parent=11 // pred_fallthru
          _
      $region12: #{tpu_custom_call.1} parent=5 // pred_fallthru
        _
      %p125 = scmp.lt.s32.totalorder %s12, 2
      // Predicated region
      $region17: #{tpu_custom_call.1} parent=5 // pred_check
        %p126 = pneg %p125
      $region18: #{tpu_custom_call.1} parent=5 // pred_check_branch
        %128 = sbr.rel (%p126) target = $region20
      $region19: #{tpu_custom_call.1} parent=5 // pred_region
        // Predicated region
        $region21: #{tpu_custom_call.1} parent=19 // pred_check
          %p129 = pneg %p46
        $region22: #{tpu_custom_call.1} parent=19 // pred_check_branch
          %131 = sbr.rel (%p129) target = $region24
        $region23: #{tpu_custom_call.1} parent=19 // pred_region
          %s132 = sand.u32 %s36, 1
          %s133 = scalar_lea.sflag [#allocation3], %s132
          %s134 = sand.u32 %s36, 1
          %s135 = smul.addr %s134, 16
          %s136 = scalar_lea.vmem [#allocation2], %s135
          %s137 = sadd.s32 %s19, %s20
          %s138 = smul.u32 2, %s137
          %s140 = ssub.s32 256, 256
          %141 = vsyncadd %s133, %s140
          %s142 = smul.addr %s138, 128
          %s143 = scalar_lea.hbm %s0, %s142
          %s145 = sshll.u32 %s136, 4
          %s146 = int_to_ptr.vmem [resolvable:$true] %s145
          %148 = dma.hbm_to_vmem [thread:$0]  %s143, 256, %s146, %s133
        $region24: #{tpu_custom_call.1} parent=19 // pred_fallthru
          _
      $region20: #{tpu_custom_call.1} parent=5 // pred_fallthru
        _
      %p149 = scmp.le.s32.totalorder 1, %s12
      %p150 = scmp.lt.s32.totalorder %s12, 3
      %p151 = pnand %p149, %p150
      %p152 = pneg %p151
      // Predicated region
      $region25: #{tpu_custom_call.1} parent=5 // pred_check
        _
      $region26: #{tpu_custom_call.1} parent=5 // pred_check_branch
        %154 = sbr.rel (%p151) target = $region28
      $region27: #{tpu_custom_call.1} parent=5 // pred_region
        %s155 = ssub.s32 %s12, 1
        %s156 = sand.u32 %s39, 1
        %s157 = scalar_lea.sflag [#allocation3], %s156
        %s158 = sand.u32 %s39, 1
        %s159 = smul.addr %s158, 16
        %s160 = scalar_lea.vmem [#allocation2], %s159
        // Predicated region
        $region29: #{tpu_custom_call.1} parent=27 // pred_check
          %p161 = pneg %p52
        $region30: #{tpu_custom_call.1} parent=27 // pred_check_branch
          %163 = sbr.rel (%p161) target = $region32
        $region31: #{tpu_custom_call.1} parent=27 // pred_region
          %164 = dma.done %s157, 256
        $region32: #{tpu_custom_call.1} parent=27 // pred_fallthru
          _
        // Predicated region
        $region33: #{tpu_custom_call.1} parent=27 // pred_check
          %p165 = pneg %p73
        $region34: #{tpu_custom_call.1} parent=27 // pred_check_branch
          %167 = sbr.rel (%p165) target = $region36
        $region35: #{tpu_custom_call.1} parent=27 // pred_region
          %168 = dma.done [#allocation5], 128
        $region36: #{tpu_custom_call.1} parent=27 // pred_fallthru
          _
        %s169 = sand.u32 %s39, 1
        %s170 = scalar_lea.sflag [#allocation3], %s169
        %s171 = sand.u32 %s39, 1
        %s172 = smul.addr %s171, 16
        %s173 = scalar_lea.vmem [#allocation2], %s172
        %p174 = pneg %p52
        %p175 = pneg %p49
        %p176 = pneg %p73
        %p177 = pneg %p70
        %p178 = pneg %p99
        %p179 = pneg %p96
        %p180 = scmp.lt.s32.totalorder %s21, 1
        %s181 = scalar_select %p180, %s21, 1
        %s182 = smul.addr %s181, 8
        %s183 = scalar_lea.vmem %s2, %s182
        %s184 = sadd.s32 %s21, %s22
        %s185 = smul.u32 2, %s184
        %p186 = scmp.lt.s32.totalorder %s21, 1
        %s187 = scalar_select %p186, %s21, 1
        %s188 = smul.addr %s187, 8
        %s189 = scalar_lea.vmem %s2, %s188
        %p190 = scmp.eq.s32.totalorder %s22, 0
        // Predicated region
        $region37: #{tpu_custom_call.1} parent=27 // pred_check
          %p191 = pneg %p190
        $region38: #{tpu_custom_call.1} parent=27 // pred_check_branch
          %193 = sbr.rel (%p191) target = $region40
        $region39: #{tpu_custom_call.1} parent=27 // pred_region
          %vm194 = vcmask 15360
          %195 = vst.msk [vmem:[%s189] sm:$0xff] %vm194, 0.0
        $region40: #{tpu_custom_call.1} parent=27 // pred_fallthru
          _
        %v196 = vld [vmem:[#allocation4] sm:$0xff]
        %v197 = vld [vmem:[%s160] sm:$0xff]
        %v198 = vld [vmem:[%s160 + $0x8] sm:$0xff]
        %vm199 = vcmask 64512
        %v201 = vsel %vm199, %v196, 0
        %203 = vmatprep.subr.mxu0 %v198
        %204 = vmatpush1.msra.mxu0 %v197
        %205 = vmatprep.subr.mxu0 0.0
        %206 = vmatpush1.msra.mxu0 0.0
        %207 = vmatprep.subr.mxu0 0.0
        %208 = vmatpush1.msra.mxu0 0.0
        %209 = vmatprep.subr.mxu0 0.0
        %210 = vmatpush1.msra.mxu0 0.0
        %211 = vmatprep.subr.mxu0 0.0
        %212 = vmatpush1.msra.mxu0 0.0
        %213 = vmatprep.subr.mxu0 0.0
        %214 = vmatpush1.msra.mxu0 0.0
        %215 = vmatprep.subr.mxu0 0.0
        %216 = vmatpush1.msra.mxu0 0.0
        %217 = vmatprep.subr.mxu0 0.0
        %218 = vmatpush1.msra.mxu0 0.0
        %219 = vmatprep.subr.mxu0 0.0
        %220 = vmatpush1.msra.mxu0 0.0
        %221 = vmatprep.subr.mxu0 0.0
        %222 = vmatpush1.msra.mxu0 0.0
        %223 = vmatprep.subr.mxu0 0.0
        %224 = vmatpush1.msra.mxu0 0.0
        %225 = vmatprep.subr.mxu0 0.0
        %226 = vmatpush1.msra.mxu0 0.0
        %227 = vmatprep.subr.mxu0 0.0
        %228 = vmatpush1.msra.mxu0 0.0
        %229 = vmatprep.subr.mxu0 0.0
        %230 = vmatpush1.msra.mxu0 0.0
        %231 = vmatprep.subr.mxu0 0.0
        %232 = vmatpush1.msra.mxu0 0.0
        %233 = vmatprep.subr.mxu0 0.0
        %234 = vmatpush1.msra.mxu0 0.0
        %235 = vmatprep.subr.mxu0 0.0
        %236 = vmatpush1.msra.mxu0 0.0
        %237 = vmatprep.subr.mxu0 0.0
        %238 = vmatpush1.msra.mxu0 0.0
        %239 = vmatprep.subr.mxu0 0.0
        %240 = vmatpush1.msra.mxu0 0.0
        %241 = vmatprep.subr.mxu0 0.0
        %242 = vmatpush1.msra.mxu0 0.0
        %243 = vmatprep.subr.mxu0 0.0
        %244 = vmatpush1.msra.mxu0 0.0
        %245 = vmatprep.subr.mxu0 0.0
        %246 = vmatpush1.msra.mxu0 0.0
        %247 = vmatprep.subr.mxu0 0.0
        %248 = vmatpush1.msra.mxu0 0.0
        %249 = vmatprep.subr.mxu0 0.0
        %250 = vmatpush1.msra.mxu0 0.0
        %251 = vmatprep.subr.mxu0 0.0
        %252 = vmatpush1.msra.mxu0 0.0
        %253 = vmatprep.subr.mxu0 0.0
        %254 = vmatpush1.msra.mxu0 0.0
        %255 = vmatprep.subr.mxu0 0.0
        %256 = vmatpush1.msra.mxu0 0.0
        %257 = vmatprep.subr.mxu0 0.0
        %258 = vmatpush1.msra.mxu0 0.0
        %259 = vmatprep.subr.mxu0 0.0
        %260 = vmatpush1.msra.mxu0 0.0
        %261 = vmatprep.subr.mxu0 0.0
        %262 = vmatpush1.msra.mxu0 0.0
        %263 = vmatprep.subr.mxu0 0.0
        %264 = vmatpush1.msra.mxu0 0.0
        %265 = vmatprep.subr.mxu0 0.0
        %266 = vmatpush1.msra.mxu0 0.0
        %267 = vmatprep.mubr.f32.mxu0 0.0
        %268 = vmatmul.mubr.f32.gmra.mrb[0].mxu0 %v201
        %v269 = vpop.f32.mrb[0].mxu0
        %v270 = vadd.f32 0.0, %v269
        %v271 = vpop.f32.mrb[0].mxu0
        %v272 = vadd.f32 0.0, %v271
        %273 = vdwg.mxu0
        %v274 = vadd.f32 %v270, %v272
        %275 = vadd.xlane.f32.xlu0 %v274
        %v276 = vpop.xlane.xlu0 %275
        %v277 = vmul.f32 %v270, %v270
        %v278 = vmul.f32 %v272, %v272
        %v279 = vadd.f32 %v277, %v278
        %280 = vadd.xlane.f32.xlu0 %v279
        %v281 = vpop.xlane.xlu0 %280
        %v282 = vld [vmem:[%s189] sm:$0xff]
        %vm283 = vcmask 7168
        %v284 = vsel %vm283, %v276, %v281
        %v285 = vadd.f32 %v282, %v284
        %vm286 = vcmask 15360
        %287 = vst.msk [vmem:[%s189] sm:$0xff] %vm286, %v285
        %p288 = scmp.lt.s32.totalorder %s21, 1
        %s289 = scalar_select %p288, %s21, 1
        %s290 = smul.addr %s289, 8
        %s291 = scalar_lea.vmem %s2, %s290
        // Predicated region
        $region41: #{tpu_custom_call.1} parent=27 // pred_check
          %p292 = pneg %p96
        $region42: #{tpu_custom_call.1} parent=27 // pred_check_branch
          %294 = sbr.rel (%p292) target = $region44
        $region43: #{tpu_custom_call.1} parent=27 // pred_region
          _
        $region44: #{tpu_custom_call.1} parent=27 // pred_fallthru
          _
      $region28: #{tpu_custom_call.1} parent=5 // pred_fallthru
        _
      %p295 = scmp.le.s32.totalorder 2, %s12
      // Predicated region
      $region45: #{tpu_custom_call.1} parent=5 // pred_check
        %p296 = pneg %p295
      $region46: #{tpu_custom_call.1} parent=5 // pred_check_branch
        %298 = sbr.rel (%p296) target = $region48
      $region47: #{tpu_custom_call.1} parent=5 // pred_region
        %s299 = ssub.s32 %s12, 2
        // Predicated region
        $region49: #{tpu_custom_call.1} parent=47 // pred_check
          %p300 = pneg %p102
        $region50: #{tpu_custom_call.1} parent=47 // pred_check_branch
          %302 = sbr.rel (%p300) target = $region52
        $region51: #{tpu_custom_call.1} parent=47 // pred_region
          %p303 = scmp.lt.s32.totalorder %s23, 1
          %s304 = scalar_select %p303, %s23, 1
          %s305 = smul.addr %s304, 8
          %s306 = scalar_lea.vmem %s2, %s305
        $region52: #{tpu_custom_call.1} parent=47 // pred_fallthru
          _
      $region48: #{tpu_custom_call.1} parent=5 // pred_fallthru
        _
    $region6: #{tpu_custom_call.1} parent=1 // loop_footer
      %s16 = sadd.s32 1, %s12
    $region7: #{tpu_custom_call.1} parent=1 // loop_footer_branch
      %11 = sbr.rel target = $region3
    $region8: #{tpu_custom_call.1} parent=1 // loop_exit
      _
    %307 = vsyncpa [#allocation3], 1
    %s308 = scalar_lea.sflag [#allocation3], 1
    %309 = vsyncpa %s308, 1
    %310 = vsyncpa [#allocation5], 1

</llo_original>
